<compile_context>
chip_gen: v6e
topology: v6e:2x2x1
jax: 0.10.0
libtpu: 0.0.40
codegen_flags: <defaults>
</compile_context>

<pallas_src>
import jax
import jax.numpy as jnp
from jax.experimental import pallas as pl
from jax.experimental.pallas import tpu as pltpu


def _normalize_kernel(x_ref, scale_ref, bias_ref, o_ref):
    # Hot path: y = x * scale + bias, with (TR, 1) params broadcasting across
    # the 128-lane axis. Compute in f32, cast on store for dtype safety.
    y = x_ref[...].astype(jnp.float32) * scale_ref[...] + bias_ref[...]
    o_ref[...] = y.astype(o_ref.dtype)


def _largest_divisor_tile(dim, unit, cap):
    """Largest multiple of `unit` that divides `dim` and is <= cap.

    Falls back to the full extent `dim` (always a legal block shape) when no
    such divisor exists (e.g. dim not a multiple of `unit`).
    """
    best = None
    limit = min(dim, cap)
    for t in range(unit, limit + 1, unit):
        if dim % t == 0:
            best = t
    return dim if best is None else best


def normalize(x, shift, scale, inplace=False):
    """Pallas equivalent of Normalize.forward.

    x:     (N, C, *spatial)   (spatial may be empty; degenerate but supported)
    shift: (C,) or (1,)
    scale: (C,) or (1,)
    """
    N, C = int(x.shape[0]), int(x.shape[1])
    hw = 1
    for s in x.shape[2:]:
        hw *= int(s)
    rows = N * C

    # --- glue: lane-dense 2D slab + per-row folded params --------------------
    x2d = x.reshape(rows, hw)
    # channelwise=False stores (1,)-shaped params; expand like torch's .expand.
    shift_c = jnp.broadcast_to(shift.astype(jnp.float32), (C,))
    scale_c = jnp.broadcast_to(scale.astype(jnp.float32), (C,))
    bias_c = -shift_c * scale_c                  # (x - shift)*scale = x*scale + bias
    scale_rows = jnp.tile(scale_c, N).reshape(rows, 1)
    bias_rows = jnp.tile(bias_c, N).reshape(rows, 1)

    # --- tile selection -------------------------------------------------------
    itemsize = jnp.dtype(x.dtype).itemsize
    # Lane tile: multiple of 128 (lane-dense, unmasked vst), up to 2048 lanes.
    # TODO(synk): degenerate hw < 128 (e.g. x with no spatial dims) falls back
    # to a full-extent lane block; correct but under-utilizes lanes.
    th = _largest_divisor_tile(hw, 128, 2048)
    # Row tile: multiple of 8, with per-buffer data tile capped at ~2 MiB so
    # double-buffered input + output stays well under every generation's
    # default scoped-VMEM limit.
    max_tile_elems = (2 * 1024 * 1024) // itemsize
    row_cap = max(8, max_tile_elems // max(th, 1))
    tr = _largest_divisor_tile(rows, 8, row_cap)

    grid = (rows // tr, hw // th)

    cost = pl.CostEstimate(
        flops=2 * rows * hw,
        transcendentals=0,
        bytes_accessed=2 * rows * hw * itemsize + 2 * rows * 4,
    )

    out2d = pl.pallas_call(
        _normalize_kernel,
        out_shape=jax.ShapeDtypeStruct((rows, hw), x.dtype),
        grid=grid,
        in_specs=[
            pl.BlockSpec((tr, th), lambda i, j: (i, j)),
            pl.BlockSpec((tr, 1), lambda i, j: (i, 0)),
            pl.BlockSpec((tr, 1), lambda i, j: (i, 0)),
        ],
        out_specs=pl.BlockSpec((tr, th), lambda i, j: (i, j)),
        compiler_params=pltpu.CompilerParams(
            dimension_semantics=("parallel", "parallel"),
        ),
        cost_estimate=cost,
        input_output_aliases={0: 0} if inplace else {},
    )(x2d, scale_rows, bias_rows)

    return out2d.reshape(x.shape)


# TODO(synk): Normalize.fit()/mean_var() (running-statistics update) is
# training-time stateful code, not part of forward(); not implemented here.


if __name__ == "__main__":
    key = jax.random.PRNGKey(0)
    kx, ks, kc = jax.random.split(key, 3)

    N, C, H, W = 2, 4, 16, 16
    x = jax.random.normal(kx, (N, C, H, W), dtype=jnp.float32)

    # Deterministic synthetic parameters (module __init__ gives zeros/ones;
    # after .fit() shift=mean, scale=rsqrt(var). Use nontrivial values here.)
    shift = jax.random.normal(ks, (C,), dtype=jnp.float32)
    scale = jax.random.uniform(kc, (C,), dtype=jnp.float32,
                               minval=0.5, maxval=1.5)

    # Reference semantics: broadcast over channel axis (dim 1).
    ref = (x - shift[None, :, None, None]) * scale[None, :, None, None]

    out = normalize(x, shift, scale)
    out = jax.block_until_ready(out)
    assert out.shape == x.shape and out.dtype == x.dtype
    assert jnp.allclose(out, ref, atol=1e-5, rtol=1e-5)

    # In-place variant (input_output_aliases) must give the same result.
    out_ip = normalize(x, shift, scale, inplace=True)
    out_ip = jax.block_until_ready(out_ip)
    assert jnp.allclose(out_ip, ref, atol=1e-5, rtol=1e-5)

    # channelwise=False parameters ((1,)-shaped, expanded over C like torch).
    shift1 = shift[:1]
    scale1 = scale[:1]
    ref1 = (x - shift1[0]) * scale1[0]
    out1 = jax.block_until_ready(normalize(x, shift1, scale1))
    assert jnp.allclose(out1, ref1, atol=1e-5, rtol=1e-5)

    print("KERNEL_OK")
</pallas_src>

<mosaic_0001>
module attributes {stable_mosaic.version = 11 : i64} {
  func.func @_normalize_kernel(%arg0: i32, %arg1: i32, %arg2: memref<8x256xf32, #tpu.memory_space<vmem>>, %arg3: memref<8x1xf32, #tpu.memory_space<vmem>>, %arg4: memref<8x1xf32, #tpu.memory_space<vmem>>, %arg5: memref<8x256xf32, #tpu.memory_space<vmem>>) attributes {dimension_semantics = [#tpu.dimension_semantics<parallel>, #tpu.dimension_semantics<parallel>], iteration_bounds = array<i64: 1, 1>, scalar_prefetch = 0 : i64, scratch_operands = 0 : i64, tpu.core_type = #tpu.core_type<tc>, window_params = [{transform_indices = @transform_0, window_bounds = array<i64: 8, 256>}, {transform_indices = @transform_1, window_bounds = array<i64: 8, 1>}, {transform_indices = @transform_2, window_bounds = array<i64: 8, 1>}, {transform_indices = @transform_3, window_bounds = array<i64: 8, 256>}]} {
    %c0 = arith.constant 0 : index
    %c0_0 = arith.constant 0 : index
    %0 = vector.load %arg2[%c0, %c0_0] : memref<8x256xf32, #tpu.memory_space<vmem>>, vector<8x256xf32>
    %c0_1 = arith.constant 0 : index
    %c0_2 = arith.constant 0 : index
    %1 = vector.load %arg3[%c0_1, %c0_2] : memref<8x1xf32, #tpu.memory_space<vmem>>, vector<8x1xf32>
    %2 = vector.broadcast %1 : vector<8x1xf32> to vector<8x256xf32>
    %3 = arith.mulf %0, %2 : vector<8x256xf32>
    %c0_3 = arith.constant 0 : index
    %c0_4 = arith.constant 0 : index
    %4 = vector.load %arg4[%c0_3, %c0_4] : memref<8x1xf32, #tpu.memory_space<vmem>>, vector<8x1xf32>
    %5 = vector.broadcast %4 : vector<8x1xf32> to vector<8x256xf32>
    %6 = arith.addf %3, %5 : vector<8x256xf32>
    %c0_5 = arith.constant 0 : index
    %c0_6 = arith.constant 0 : index
    %7 = vector.load %arg5[%c0_5, %c0_6] : memref<8x256xf32, #tpu.memory_space<vmem>>, vector<8x256xf32>
    tpu.vector_store %arg5[%c0_5, %c0_6], %6 {strides = array<i32>} : memref<8x256xf32, #tpu.memory_space<vmem>>, vector<8x256xf32>,
    return
  }
  func.func @transform_0(%arg0: i32, %arg1: i32) -> (i32, i32) {
    %c0_i32 = arith.constant 0 : i32
    return %arg0, %arg1 : i32, i32
  }
  func.func @transform_1(%arg0: i32, %arg1: i32) -> (i32, i32) {
    %c0_i32 = arith.constant 0 : i32
    %c0_i32_0 = arith.constant 0 : i32
    return %arg0, %c0_i32 : i32, i32
  }
  func.func @transform_2(%arg0: i32, %arg1: i32) -> (i32, i32) {
    %c0_i32 = arith.constant 0 : i32
    %c0_i32_0 = arith.constant 0 : i32
    return %arg0, %c0_i32 : i32, i32
  }
  func.func @transform_3(%arg0: i32, %arg1: i32) -> (i32, i32) {
    %c0_i32 = arith.constant 0 : i32
    return %arg0, %arg1 : i32, i32
  }
}

</mosaic_0001>

<llo_original>
// kernel: tpu_custom_call.1
$region0: #{tpu_custom_call.1}
  #allocation0 [shape = 'u32[]', space=smem, size = 0x4, offset = 0x4, fixed_abs, tag = 'smem constant byte address 0x4 - core index']
  #allocation1 [shape = 'u32[144,128]{1,0:T(1,128)}', space=vmem, size = 0x12000, scoped, tag = 'internal scratch']
  %s0 = inlined_call_operand.vmem [shape: f32[8,256], index: 0, kind: input, shape index: {}]
  %s1 = inlined_call_operand.vmem [shape: f32[8,1], index: 1, kind: input, shape index: {}]
  %s2 = inlined_call_operand.vmem [shape: f32[8,1], index: 2, kind: input, shape index: {}]
  %s3 = inlined_call_operand.hbm [shape: f32[8,256], index: 3, kind: output, shape index: {}]
  %s4 = sld [smem:[#allocation0]]
  $region22: #{tpu_custom_call.1} parent=0
    _
  %s6 = ssub.s32 1, %s4
  %s7 = scalar_select 0, %s6, %s4
  $region1: #{tpu_custom_call.1} parent=0
    #allocation2 [shape = 'u8[8192]{0}', space=vmem, size = 0x2000, scoped, tag = 'output window, operand 0, single buffered']
    #allocation3 [shape = 's32[1]{0}', space=sflag, size = 0x4, scoped, tag = 'scoped memory for tpu_custom_call.1']
    %8 = vsyncpa [#allocation3], 0
    // Predicated region
    $region2: #{tpu_custom_call.1} parent=1 // pred_check
      _
    $region3: #{tpu_custom_call.1} parent=1 // pred_check_branch
      %10 = sbr.rel (0) target = $region5
    $region4: #{tpu_custom_call.1} parent=1 // pred_region
      _
    $region5: #{tpu_custom_call.1} parent=1 // pred_fallthru
      _
    // Predicated region
    $region6: #{tpu_custom_call.1} parent=1 // pred_check
      _
    $region7: #{tpu_custom_call.1} parent=1 // pred_check_branch
      %12 = sbr.rel (0) target = $region9
    $region8: #{tpu_custom_call.1} parent=1 // pred_region
      _
    $region9: #{tpu_custom_call.1} parent=1 // pred_fallthru
      _
    // Predicated region
    $region10: #{tpu_custom_call.1} parent=1 // pred_check
      _
    $region11: #{tpu_custom_call.1} parent=1 // pred_check_branch
      %14 = sbr.rel (0) target = $region13
    $region12: #{tpu_custom_call.1} parent=1 // pred_region
      _
    $region13: #{tpu_custom_call.1} parent=1 // pred_fallthru
      _
    %v15 = vld [vmem:[%s0] sm:$0xff]
    %v16 = vld [vmem:[%s0 + $0x8] sm:$0xff]
    %v17 = vld [vmem:[%s1] sm:$0xff]
    %19 = vset.pattern.permute.xlu0 0
    %20 = vperm.xlu0 %19, %v17
    %v21 = vpop.permute.xlu0 %20
    %v23 = vmul.f32 %v15, %v21
    %v24 = vmul.f32 %v16, %v21
    %v25 = vld [vmem:[%s2] sm:$0xff]
    %27 = vset.pattern.permute.xlu0 0
    %28 = vperm.xlu0 %27, %v25
    %v29 = vpop.permute.xlu0 %28
    %v31 = vadd.f32 %v23, %v29
    %v32 = vadd.f32 %v24, %v29
    %33 = vst [vmem:[#allocation2] sm:$0xff] %v31
    %34 = vst [vmem:[#allocation2 + $0x8] sm:$0xff] %v32
    // Predicated region
    $region14: #{tpu_custom_call.1} parent=1 // pred_check
      _
    $region15: #{tpu_custom_call.1} parent=1 // pred_check_branch
      %36 = sbr.rel (0) target = $region17
    $region16: #{tpu_custom_call.1} parent=1 // pred_region
      %s38 = ssub.s32 256, 256
      %39 = vsyncadd [#allocation3], %s38
      %s41 = sshll.u32 [#allocation2], 4
      %s42 = int_to_ptr.vmem [resolvable:$true] %s41
      %44 = dma.vmem_to_hbm [thread:$0]  %s42, 256, %s3, [#allocation3]
    $region17: #{tpu_custom_call.1} parent=1 // pred_fallthru
      _
    // Predicated region
    $region18: #{tpu_custom_call.1} parent=1 // pred_check
      _
    $region19: #{tpu_custom_call.1} parent=1 // pred_check_branch
      %46 = sbr.rel (0) target = $region21
    $region20: #{tpu_custom_call.1} parent=1 // pred_region
      %47 = dma.done [#allocation3], 256
    $region21: #{tpu_custom_call.1} parent=1 // pred_fallthru
      _
    %48 = vsyncpa [#allocation3], 1

</llo_original>
